<compile_context>
chip_gen: v6e
topology: v6e:2x2x1
jax: 0.10.0
libtpu: 0.0.40
codegen_flags: <defaults>
</compile_context>

<pallas_src>
import jax
import jax.numpy as jnp
from jax.experimental import pallas as pl
from jax.experimental.pallas import tpu as pltpu


def _conv1x1_kernel(x_ref, w_ref, o_ref):
    # x_ref: (C_in, TL) tile, w_ref: (C_out, C_in), o_ref: (C_out, TL) tile.
    # K = C_in is tiny, so this is an HBM-roofline kernel, not an MXU one;
    # jnp.dot keeps the contraction in one op and accumulates in f32.
    o_ref[...] = jnp.dot(
        w_ref[...], x_ref[...], preferred_element_type=jnp.float32
    ).astype(o_ref.dtype)


def _pick_lane_tile(length, max_tile=1024):
    """Pick lane tile TL: a 128-multiple when tiling, full extent if small."""
    if length <= max_tile:
        return length                       # full-extent block is always legal
    for tl in range(max_tile, 0, -128):     # prefer an exact divisor (no pad)
        if length % tl == 0:
            return tl
    return max_tile                         # fall back: pad L up to k*max_tile


def projector_block(x_ncl, weight, *, max_lane_tile=1024):
    """Conv1d(kernel_size=1, bias=False) forward.

    Args:
      x_ncl:  (N, C_in, L)            -- PyTorch NCL layout.
      weight: (C_out, C_in), or the raw PyTorch (C_out, C_in, 1) Conv1d weight.
    Returns:
      (N, C_out, L) array, same dtype as x.
    """
    if weight.ndim == 3:                    # raw Conv1d weight -> drop k=1 axis
        weight = weight[:, :, 0]

    n, c_in, length = x_ncl.shape
    c_out = weight.shape[0]

    tl = _pick_lane_tile(length, max_lane_tile)
    padded_len = pl.cdiv(length, tl) * tl
    x_in = x_ncl
    if padded_len != length:                # only if no 128-multiple divisor
        x_in = jnp.pad(x_ncl, ((0, 0), (0, 0), (0, padded_len - length)))
    l_blocks = padded_len // tl

    itemsize = jnp.dtype(x_ncl.dtype).itemsize
    cost = pl.CostEstimate(
        flops=2 * n * length * c_in * c_out,
        transcendentals=0,
        bytes_accessed=(n * c_in * length + c_out * c_in
                        + n * c_out * length) * itemsize,
    )

    out = pl.pallas_call(
        _conv1x1_kernel,
        out_shape=jax.ShapeDtypeStruct((n, c_out, padded_len), x_ncl.dtype),
        grid_spec=pltpu.PrefetchScalarGridSpec(
            num_scalar_prefetch=0,
            grid=(n, l_blocks),
            in_specs=[
                # x: batch dim squeezed, full C_in (4 < 8, so keep full
                # extent per the (8,128) rule), lane-dense L tile.
                # TODO(synk): add pipeline_mode=pl.Buffered(3) here if v7x
                # profiling shows exposed DMA after tiling.
                pl.BlockSpec((None, c_in, tl), lambda b, l: (b, 0, l)),
                # weight: constant index -> DMA'd once, VMEM-resident.
                pl.BlockSpec((c_out, c_in), lambda b, l: (0, 0)),
            ],
            out_specs=pl.BlockSpec((None, c_out, tl), lambda b, l: (b, 0, l)),
        ),
        compiler_params=pltpu.CompilerParams(
            dimension_semantics=("parallel", "parallel"),
        ),
        cost_estimate=cost,
    )(x_in, weight)

    if padded_len != length:
        out = out[:, :, :length]
    return out


if __name__ == "__main__":
    key = jax.random.PRNGKey(0)
    kx, kw, kx2 = jax.random.split(key, 3)

    # Small shapes consistent with the module: batch=2, in=4, out=8, L=16.
    N, C_IN, C_OUT, L = 2, 4, 8, 16
    x = jax.random.normal(kx, (N, C_IN, L), dtype=jnp.float32)
    w = jax.random.normal(kw, (C_OUT, C_IN), dtype=jnp.float32) * 0.1

    out = jax.block_until_ready(projector_block(x, w))
    ref = jnp.einsum("oc,ncl->nol", w, x)
    assert out.shape == (N, C_OUT, L)
    assert jnp.allclose(out, ref, atol=1e-5, rtol=1e-5)

    # Second check exercising the tiled / pipelined path (L > one lane tile).
    L2 = 2048
    x2 = jax.random.normal(kx2, (N, C_IN, L2), dtype=jnp.float32)
    out2 = jax.block_until_ready(projector_block(x2, w))
    ref2 = jnp.einsum("oc,ncl->nol", w, x2)
    assert out2.shape == (N, C_OUT, L2)
    assert jnp.allclose(out2, ref2, atol=1e-5, rtol=1e-5)

    print("KERNEL_OK")
</pallas_src>

<mosaic_0001>
module attributes {stable_mosaic.version = 11 : i64} {
  func.func @_conv1x1_kernel(%arg0: i32, %arg1: i32, %arg2: memref<1x4x16xf32, #tpu.memory_space<vmem>>, %arg3: memref<8x4xf32, #tpu.memory_space<vmem>>, %arg4: memref<1x8x16xf32, #tpu.memory_space<vmem>>) attributes {dimension_semantics = [#tpu.dimension_semantics<parallel>, #tpu.dimension_semantics<parallel>], iteration_bounds = array<i64: 2, 1>, scalar_prefetch = 0 : i64, scratch_operands = 0 : i64, tpu.core_type = #tpu.core_type<tc>, window_params = [{transform_indices = @transform_0, window_bounds = array<i64: 1, 4, 16>}, {pipeline_mode = #tpu.pipeline_mode<synchronous>, transform_indices = @transform_1, window_bounds = array<i64: 8, 4>}, {transform_indices = @transform_2, window_bounds = array<i64: 1, 8, 16>}]} {
    %c0 = arith.constant 0 : index
    %c0_0 = arith.constant 0 : index
    %0 = vector.load %arg3[%c0, %c0_0] : memref<8x4xf32, #tpu.memory_space<vmem>>, vector<8x4xf32>
    %c0_1 = arith.constant 0 : index
    %c0_2 = arith.constant 0 : index
    %c0_3 = arith.constant 0 : index
    %1 = vector.load %arg2[%c0_1, %c0_2, %c0_3] : memref<1x4x16xf32, #tpu.memory_space<vmem>>, vector<1x4x16xf32>
    %2 = vector.shape_cast %1 : vector<1x4x16xf32> to vector<4x16xf32>
    %cst = arith.constant dense<0.000000e+00> : vector<8x16xf32>
    %3 = tpu.matmul %0, %2, %cst {dimension_numbers = #tpu.dot_dimension_numbers<[1], [0], [0], [1], [0, 0, 1, 1], [], []>} : vector<8x4xf32>, vector<4x16xf32>, vector<8x16xf32> -> vector<8x16xf32>
    %c0_4 = arith.constant 0 : index
    %c0_5 = arith.constant 0 : index
    %c0_6 = arith.constant 0 : index
    %4 = vector.load %arg4[%c0_4, %c0_5, %c0_6] : memref<1x8x16xf32, #tpu.memory_space<vmem>>, vector<1x8x16xf32>
    %5 = vector.shape_cast %4 : vector<1x8x16xf32> to vector<8x16xf32>
    %6 = vector.shape_cast %3 : vector<8x16xf32> to vector<1x8x16xf32>
    tpu.vector_store %arg4[%c0_4, %c0_5, %c0_6], %6 {strides = array<i32>} : memref<1x8x16xf32, #tpu.memory_space<vmem>>, vector<1x8x16xf32>,
    return
  }
  func.func @transform_0(%arg0: i32, %arg1: i32) -> (i32, i32, i32) {
    %c0_i32 = arith.constant 0 : i32
    %c0_i32_0 = arith.constant 0 : i32
    return %arg0, %c0_i32, %arg1 : i32, i32, i32
  }
  func.func @transform_1(%arg0: i32, %arg1: i32) -> (i32, i32) {
    %c0_i32 = arith.constant 0 : i32
    %c0_i32_0 = arith.constant 0 : i32
    %c0_i32_1 = arith.constant 0 : i32
    return %c0_i32, %c0_i32_0 : i32, i32
  }
  func.func @transform_2(%arg0: i32, %arg1: i32) -> (i32, i32, i32) {
    %c0_i32 = arith.constant 0 : i32
    %c0_i32_0 = arith.constant 0 : i32
    return %arg0, %c0_i32, %arg1 : i32, i32, i32
  }
}

</mosaic_0001>

<llo_original>
// kernel: tpu_custom_call.1
$region0: #{tpu_custom_call.1}
  #allocation0 [shape = 'u32[]', space=smem, size = 0x4, offset = 0x4, fixed_abs, tag = 'smem constant byte address 0x4 - core index']
  #allocation1 [shape = 'u32[144,128]{1,0:T(1,128)}', space=vmem, size = 0x12000, scoped, tag = 'internal scratch']
  %s0 = inlined_call_operand.vmem [shape: f32[2,4,16], index: 0, kind: input, shape index: {}]
  %s1 = inlined_call_operand.vmem [shape: f32[8,4], index: 1, kind: input, shape index: {}]
  %s2 = inlined_call_operand.hbm [shape: f32[2,8,16], index: 2, kind: output, shape index: {}]
  %s3 = sld [smem:[#allocation0]]
  $region41: #{tpu_custom_call.1} parent=0
    _
  %s5 = ssub.s32 1, %s3
  %s6 = scalar_select 0, %s5, %s3
  $region1: #{tpu_custom_call.1} parent=0
    #allocation2 [shape = 'u8[8192]{0}', space=vmem, size = 0x2000, scoped, tag = 'output window, operand 0']
    #allocation3 [shape = 's32[2]{0}', space=sflag, size = 0x8, scoped, tag = 'scoped memory for tpu_custom_call.1']
    %7 = vsyncpa [#allocation3], 0
    %s8 = scalar_lea.sflag [#allocation3], 1
    %9 = vsyncpa %s8, 0
    loop: start=0, step=1, limit=4
    $region2: #{tpu_custom_call.1} parent=1 // loop_pre_header
      _
    $region3: #{tpu_custom_call.1} parent=1 // loop_header
      %s11 = sphi 0, %s15
      %p12 = scmp.ge.s32.totalorder %s11, 4
      %s18 = sphi 0, %s30
      %s19 = sphi 0, %s26
      %s20 = sphi 0, %s18
      %s21 = sphi 0, %s19
      %s22 = sphi 0, %s20
      %s23 = sphi 0, %s21
      %s35 = sphi 0, %s37
      %s38 = sphi 0, %s35
      %s39 = sphi 0, %s38
      %s55 = sphi 0, %s39
      %s59 = sphi 0, %s59
      %s61 = sphi 0, %s59
      %s62 = sphi 0, %s61
      %s76 = sphi 0, %s62
      %s84 = sphi 0, %s86
      %s87 = sphi 0, %s84
      %s88 = sphi 0, %s87
      %s104 = sphi 0, %s88
    $region4: #{tpu_custom_call.1} parent=1 // loop_header_branch
      %14 = sbr.rel (%p12) target = $region8
    $region5: #{tpu_custom_call.1} parent=1 // loop_body
      %s16 = ssub.s32 %s11, 1
      %s17 = ssub.s32 %s11, 2
      %s24 = sadd.s32 1, %s19
      %p25 = scmp.ge.s32.totalorder %s24, 1
      %s26 = scalar_select %p25, 0, %s24
      %s27 = sadd.s32 1, %s18
      %s28 = scalar_select %p25, %s27, %s18
      %p29 = scmp.ge.s32.totalorder %s28, 2
      %s30 = scalar_select %p29, 0, %s28
      %s31 = ssub.s32 %s18, %s30
      %s32 = ssub.s32 %s19, %s26
      %s33 = sor.u32 %s31, %s32
      %p34 = scmp.eq.s32.totalorder %s33, 0
      %s36 = sadd.s32 %s35, 1
      %s37 = scalar_select %p34, %s35, %s36
      %p40 = pneg %p34
      %p41 = scmp.eq.s32.totalorder %s11, 1
      %p42 = por %p40, %p41
      %p43 = scmp.ne.s32.totalorder %s35, %s38
      %p44 = scmp.eq.s32.totalorder %s11, 0
      %p45 = por %p43, %p44
      %p46 = scmp.ne.s32.totalorder %s35, %s38
      %p47 = scmp.eq.s32.totalorder %s16, 1
      %p48 = por %p46, %p47
      %p49 = scmp.ne.s32.totalorder %s38, %s39
      %p50 = scmp.eq.s32.totalorder %s16, 0
      %p51 = por %p49, %p50
      %p52 = scmp.ne.s32.totalorder %s38, %s39
      %p53 = scmp.eq.s32.totalorder %s17, 1
      %p54 = por %p52, %p53
      %p56 = scmp.ne.s32.totalorder %s39, %s55
      %p57 = scmp.eq.s32.totalorder %s17, 0
      %p58 = por %p56, %p57
      %s60 = sadd.s32 %s59, 1
      %p63 = scmp.eq.s32.totalorder %s11, 1
      %p64 = scmp.ne.s32.totalorder %s59, %s61
      %p65 = scmp.eq.s32.totalorder %s11, 0
      %p66 = por %p64, %p65
      %p67 = scmp.ne.s32.totalorder %s59, %s61
      %p68 = scmp.eq.s32.totalorder %s16, 1
      %p69 = por %p67, %p68
      %p70 = scmp.ne.s32.totalorder %s61, %s62
      %p71 = scmp.eq.s32.totalorder %s16, 0
      %p72 = por %p70, %p71
      %p73 = scmp.ne.s32.totalorder %s61, %s62
      %p74 = scmp.eq.s32.totalorder %s17, 1
      %p75 = por %p73, %p74
      %p77 = scmp.ne.s32.totalorder %s62, %s76
      %p78 = scmp.eq.s32.totalorder %s17, 0
      %p79 = por %p77, %p78
      %s80 = ssub.s32 %s18, %s30
      %s81 = ssub.s32 %s19, %s26
      %s82 = sor.u32 %s80, %s81
      %p83 = scmp.eq.s32.totalorder %s82, 0
      %s85 = sadd.s32 %s84, 1
      %s86 = scalar_select %p83, %s84, %s85
      %p89 = pneg %p83
      %p90 = scmp.eq.s32.totalorder %s11, 1
      %p91 = por %p89, %p90
      %p92 = scmp.ne.s32.totalorder %s84, %s87
      %p93 = scmp.eq.s32.totalorder %s11, 0
      %p94 = por %p92, %p93
      %p95 = scmp.ne.s32.totalorder %s84, %s87
      %p96 = scmp.eq.s32.totalorder %s16, 1
      %p97 = por %p95, %p96
      %p98 = scmp.ne.s32.totalorder %s87, %s88
      %p99 = scmp.eq.s32.totalorder %s16, 0
      %p100 = por %p98, %p99
      %p101 = scmp.ne.s32.totalorder %s87, %s88
      %p102 = scmp.eq.s32.totalorder %s17, 1
      %p103 = por %p101, %p102
      %p105 = scmp.ne.s32.totalorder %s88, %s104
      %p106 = scmp.eq.s32.totalorder %s17, 0
      %p107 = por %p105, %p106
      %p108 = scmp.le.s32.totalorder 1, %s11
      %p109 = scmp.lt.s32.totalorder %s11, 3
      %p110 = pnand %p108, %p109
      %p111 = pneg %p110
      // Predicated region
      $region9: #{tpu_custom_call.1} parent=5 // pred_check
        _
      $region10: #{tpu_custom_call.1} parent=5 // pred_check_branch
        %113 = sbr.rel (%p110) target = $region12
      $region11: #{tpu_custom_call.1} parent=5 // pred_region
        %s114 = ssub.s32 %s11, 1
        // Predicated region
        $region13: #{tpu_custom_call.1} parent=11 // pred_check
          %p115 = pneg %p72
        $region14: #{tpu_custom_call.1} parent=11 // pred_check_branch
          %117 = sbr.rel (%p115) target = $region16
        $region15: #{tpu_custom_call.1} parent=11 // pred_region
          _
        $region16: #{tpu_custom_call.1} parent=11 // pred_fallthru
          _
      $region12: #{tpu_custom_call.1} parent=5 // pred_fallthru
        _
      %p118 = scmp.lt.s32.totalorder %s11, 2
      // Predicated region
      $region17: #{tpu_custom_call.1} parent=5 // pred_check
        %p119 = pneg %p118
      $region18: #{tpu_custom_call.1} parent=5 // pred_check_branch
        %121 = sbr.rel (%p119) target = $region20
      $region19: #{tpu_custom_call.1} parent=5 // pred_region
        // Predicated region
        $region21: #{tpu_custom_call.1} parent=19 // pred_check
          %p122 = pneg %p45
        $region22: #{tpu_custom_call.1} parent=19 // pred_check_branch
          %124 = sbr.rel (%p122) target = $region24
        $region23: #{tpu_custom_call.1} parent=19 // pred_region
          %p125 = scmp.lt.s32.totalorder %s18, 1
          %s126 = scalar_select %p125, %s18, 1
          %p127 = scmp.lt.s32.totalorder %s19, 0
          %s128 = scalar_select %p127, %s19, 0
          %s129 = sadd.s32 %s128, %s126
          %s130 = smul.addr %s129, 4
          %s131 = scalar_lea.vmem %s0, %s130
        $region24: #{tpu_custom_call.1} parent=19 // pred_fallthru
          _
      $region20: #{tpu_custom_call.1} parent=5 // pred_fallthru
        _
      %p132 = scmp.le.s32.totalorder 1, %s11
      %p133 = scmp.lt.s32.totalorder %s11, 3
      %p134 = pnand %p132, %p133
      %p135 = pneg %p134
      // Predicated region
      $region25: #{tpu_custom_call.1} parent=5 // pred_check
        _
      $region26: #{tpu_custom_call.1} parent=5 // pred_check_branch
        %137 = sbr.rel (%p134) target = $region28
      $region27: #{tpu_custom_call.1} parent=5 // pred_region
        %s138 = ssub.s32 %s11, 1
        %p139 = scmp.lt.s32.totalorder %s20, 1
        %s140 = scalar_select %p139, %s20, 1
        %p141 = scmp.lt.s32.totalorder %s21, 0
        %s142 = scalar_select %p141, %s21, 0
        %s143 = sadd.s32 %s142, %s140
        %s144 = smul.addr %s143, 4
        %s145 = scalar_lea.vmem %s0, %s144
        %p146 = pneg %p51
        %p147 = pneg %p48
        %p148 = pneg %p72
        %p149 = pneg %p69
        %p150 = pneg %p100
        %p151 = pneg %p97
        %s152 = sand.u32 %s87, 1
        %s153 = scalar_lea.sflag [#allocation3], %s152
        %s154 = sand.u32 %s87, 1
        %s155 = smul.addr %s154, 8
        %s156 = scalar_lea.vmem [#allocation2], %s155
        %p157 = scmp.lt.s32.totalorder %s20, 1
        %s158 = scalar_select %p157, %s20, 1
        %p159 = scmp.lt.s32.totalorder %s21, 0
        %s160 = scalar_select %p159, %s21, 0
        %s161 = sadd.s32 %s160, %s158
        %s162 = smul.addr %s161, 4
        %s163 = scalar_lea.vmem %s0, %s162
        %v164 = vld [vmem:[%s1] sm:$0xff]
        %v165 = vld [vmem:[%s163] sm:$0xf]
        %vm166 = vcmask 31744
        %v168 = vsel %vm166, %v164, 0
        %vm170 = vcmask 1043456
        %v172 = vsel %vm170, %v165, 0
        %174 = vmatprep.subr.mxu0 0.0
        %175 = vmatpush1.msra.mxu0 0.0
        %176 = vmatprep.subr.mxu0 0.0
        %177 = vmatpush1.msra.mxu0 0.0
        %178 = vmatprep.subr.mxu0 0.0
        %179 = vmatpush1.msra.mxu0 0.0
        %180 = vmatprep.subr.mxu0 0.0
        %181 = vmatpush1.msra.mxu0 0.0
        %182 = vmatprep.subr.mxu0 0.0
        %183 = vmatpush1.msra.mxu0 0.0
        %184 = vmatprep.subr.mxu0 0.0
        %185 = vmatpush1.msra.mxu0 0.0
        %186 = vmatprep.subr.mxu0 0.0
        %187 = vmatpush1.msra.mxu0 0.0
        %188 = vmatprep.subr.mxu0 0.0
        %189 = vmatpush1.msra.mxu0 0.0
        %190 = vmatprep.subr.mxu0 0.0
        %191 = vmatpush1.msra.mxu0 0.0
        %192 = vmatprep.subr.mxu0 0.0
        %193 = vmatpush1.msra.mxu0 0.0
        %194 = vmatprep.subr.mxu0 0.0
        %195 = vmatpush1.msra.mxu0 0.0
        %196 = vmatprep.subr.mxu0 0.0
        %197 = vmatpush1.msra.mxu0 0.0
        %198 = vmatprep.subr.mxu0 0.0
        %199 = vmatpush1.msra.mxu0 0.0
        %200 = vmatprep.subr.mxu0 0.0
        %201 = vmatpush1.msra.mxu0 0.0
        %202 = vmatprep.subr.mxu0 0.0
        %203 = vmatpush1.msra.mxu0 0.0
        %204 = vmatprep.subr.mxu0 0.0
        %205 = vmatpush1.msra.mxu0 %v172
        %206 = vmatprep.subr.mxu0 0.0
        %207 = vmatpush2.msra.mxu0 0.0
        %208 = vmatprep.subr.mxu0 0.0
        %209 = vmatpush2.msra.mxu0 0.0
        %210 = vmatprep.subr.mxu0 0.0
        %211 = vmatpush2.msra.mxu0 0.0
        %212 = vmatprep.subr.mxu0 0.0
        %213 = vmatpush2.msra.mxu0 0.0
        %214 = vmatprep.subr.mxu0 0.0
        %215 = vmatpush2.msra.mxu0 0.0
        %216 = vmatprep.subr.mxu0 0.0
        %217 = vmatpush2.msra.mxu0 0.0
        %218 = vmatprep.subr.mxu0 0.0
        %219 = vmatpush2.msra.mxu0 0.0
        %220 = vmatprep.subr.mxu0 0.0
        %221 = vmatpush2.msra.mxu0 0.0
        %222 = vmatprep.subr.mxu0 0.0
        %223 = vmatpush2.msra.mxu0 0.0
        %224 = vmatprep.subr.mxu0 0.0
        %225 = vmatpush2.msra.mxu0 0.0
        %226 = vmatprep.subr.mxu0 0.0
        %227 = vmatpush2.msra.mxu0 0.0
        %228 = vmatprep.subr.mxu0 0.0
        %229 = vmatpush2.msra.mxu0 0.0
        %230 = vmatprep.subr.mxu0 0.0
        %231 = vmatpush2.msra.mxu0 0.0
        %232 = vmatprep.subr.mxu0 0.0
        %233 = vmatpush2.msra.mxu0 0.0
        %234 = vmatprep.subr.mxu0 0.0
        %235 = vmatpush2.msra.mxu0 0.0
        %236 = vmatprep.subr.mxu0 0.0
        %237 = vmatpush2.msra.mxu0 0.0
        %238 = vmatprep.mubr.f32.mxu0 0.0
        %239 = vmatmul.mubr.f32.gmra.mxu0 %v168
        %v240 = vpop.f32.mrf.mxu0
        %v241 = vadd.f32 0.0, %v240
        %v242 = vpop.f32.mrf.mxu0
        %243 = vdwg.mxu0
        %vm244 = vcmask 130048
        %245 = vst.msk [vmem:[%s156] sm:$0xff] %vm244, %v241
        %s246 = sand.u32 %s87, 1
        %s247 = scalar_lea.sflag [#allocation3], %s246
        %s248 = sand.u32 %s87, 1
        %s249 = smul.addr %s248, 8
        %s250 = scalar_lea.vmem [#allocation2], %s249
        // Predicated region
        $region29: #{tpu_custom_call.1} parent=27 // pred_check
          %p251 = pneg %p97
        $region30: #{tpu_custom_call.1} parent=27 // pred_check_branch
          %253 = sbr.rel (%p251) target = $region32
        $region31: #{tpu_custom_call.1} parent=27 // pred_region
          %s255 = ssub.s32 128, 128
          %256 = vsyncadd %s247, %s255
          %s257 = sadd.s32 %s21, %s20
          %s258 = smul.addr %s257, 128
          %s259 = scalar_lea.hbm %s2, %s258
          %s261 = sshll.u32 %s250, 4
          %s262 = int_to_ptr.vmem [resolvable:$true] %s261
          %264 = dma.vmem_to_hbm [thread:$0]  %s262, 128, %s259, %s247
        $region32: #{tpu_custom_call.1} parent=27 // pred_fallthru
          _
      $region28: #{tpu_custom_call.1} parent=5 // pred_fallthru
        _
      %p265 = scmp.le.s32.totalorder 2, %s11
      // Predicated region
      $region33: #{tpu_custom_call.1} parent=5 // pred_check
        %p266 = pneg %p265
      $region34: #{tpu_custom_call.1} parent=5 // pred_check_branch
        %268 = sbr.rel (%p266) target = $region36
      $region35: #{tpu_custom_call.1} parent=5 // pred_region
        %s269 = ssub.s32 %s11, 2
        // Predicated region
        $region37: #{tpu_custom_call.1} parent=35 // pred_check
          %p270 = pneg %p103
        $region38: #{tpu_custom_call.1} parent=35 // pred_check_branch
          %272 = sbr.rel (%p270) target = $region40
        $region39: #{tpu_custom_call.1} parent=35 // pred_region
          %s273 = sand.u32 %s88, 1
          %s274 = scalar_lea.sflag [#allocation3], %s273
          %s275 = sand.u32 %s88, 1
          %s276 = smul.addr %s275, 8
          %s277 = scalar_lea.vmem [#allocation2], %s276
          %278 = dma.done %s274, 128
        $region40: #{tpu_custom_call.1} parent=35 // pred_fallthru
          _
      $region36: #{tpu_custom_call.1} parent=5 // pred_fallthru
        _
    $region6: #{tpu_custom_call.1} parent=1 // loop_footer
      %s15 = sadd.s32 1, %s11
    $region7: #{tpu_custom_call.1} parent=1 // loop_footer_branch
      %10 = sbr.rel target = $region3
    $region8: #{tpu_custom_call.1} parent=1 // loop_exit
      _
    %279 = vsyncpa [#allocation3], 1
    %s280 = scalar_lea.sflag [#allocation3], 1
    %281 = vsyncpa %s280, 1

</llo_original>
